<compile_context>
chip_gen: v6e
topology: v6e:2x2x1
jax: 0.10.0
libtpu: 0.0.40
codegen_flags: <defaults>
</compile_context>

<pallas_src>
import functools

import jax
import jax.numpy as jnp
from jax.experimental import pallas as pl
from jax.experimental.pallas import tpu as pltpu


# ----------------------------------------------------------------------------
# Fused MLP kernel: (Linear + ReLU + Dropout) * N  ->  Linear
# ----------------------------------------------------------------------------
def _mlp_kernel(*refs, num_hidden):
    # refs layout:
    #   x_ref,
    #   [w_ref (in,out), b_ref (1,out), mask_ref (B,out)] * num_hidden,
    #   w_out_ref (in,out), b_out_ref (1,out),
    #   out_ref (B, num_class)
    x_ref = refs[0]
    out_ref = refs[-1]

    h = x_ref[...]
    idx = 1
    for _ in range(num_hidden):
        w_ref, b_ref, m_ref = refs[idx], refs[idx + 1], refs[idx + 2]
        idx += 3
        h = jnp.dot(h, w_ref[...], preferred_element_type=jnp.float32) + b_ref[...]
        h = jnp.maximum(h, 0.0)            # ReLU
        h = h * m_ref[...]                 # inverted dropout (scale folded into mask)

    w_out_ref, b_out_ref = refs[idx], refs[idx + 1]
    out_ref[...] = (
        jnp.dot(h, w_out_ref[...], preferred_element_type=jnp.float32) + b_out_ref[...]
    )


def _pick_batch_block(b):
    # Tile the batch only when it is large and lane/sublane friendly; otherwise run
    # the whole batch in a single grid step (grid is a sequential loop on TPU, so
    # tiny per-step work would be pure overhead).
    for cand in (512, 256, 128):
        if b > cand and b % cand == 0:
            return cand
    return b


def dnn_classifier_forward(x, params, masks):
    """x: (B, DNN_IN[0]) f32 ; masks: list of (B, DNN_HIDDEN[i]) f32 -> (B, NUM_CLASS)."""
    b = x.shape[0]
    num_hidden = len(params["hidden"])
    num_class = params["out_wt"].shape[1]

    block_b = _pick_batch_block(b)
    grid = (b // block_b,)

    inputs = [x]
    in_specs = [pl.BlockSpec((block_b, x.shape[1]), lambda i: (i, 0))]
    for layer, m in zip(params["hidden"], masks):
        wt, bias = layer["wt"], layer["b"]
        inputs += [wt, bias, m]
        in_specs += [
            pl.BlockSpec(wt.shape, lambda i: (0, 0)),           # weights resident
            pl.BlockSpec(bias.shape, lambda i: (0, 0)),
            pl.BlockSpec((block_b, m.shape[1]), lambda i: (i, 0)),
        ]
    inputs += [params["out_wt"], params["out_b"]]
    in_specs += [
        pl.BlockSpec(params["out_wt"].shape, lambda i: (0, 0)),
        pl.BlockSpec(params["out_b"].shape, lambda i: (0, 0)),
    ]

    kern = functools.partial(_mlp_kernel, num_hidden=num_hidden)
    return pl.pallas_call(
        kern,
        out_shape=jax.ShapeDtypeStruct((b, num_class), jnp.float32),
        grid=grid,
        in_specs=in_specs,
        out_specs=pl.BlockSpec((block_b, num_class), lambda i: (i, 0)),
        compiler_params=pltpu.CompilerParams(dimension_semantics=("parallel",)),
    )(*inputs)


# ----------------------------------------------------------------------------
# Module config, parameter init, dropout masks, pure-JAX reference
# ----------------------------------------------------------------------------
class Config:
    DNN_NUM_HIDDENS = 2
    DNN_IN = [16, 64]          # DNN_IN[i+1] == DNN_HIDDEN[i] (chained Linears)
    DNN_HIDDEN = [64, 32]
    NUM_CLASS = 8


def init_params(config, key):
    params = {"hidden": []}
    for i in range(config.DNN_NUM_HIDDENS):
        key, kw, kb = jax.random.split(key, 3)
        fan_in, fan_out = config.DNN_IN[i], config.DNN_HIDDEN[i]
        bound = 1.0 / jnp.sqrt(fan_in)
        w = jax.random.uniform(kw, (fan_out, fan_in), jnp.float32, -bound, bound)
        b = jax.random.uniform(kb, (fan_out,), jnp.float32, -bound, bound)
        # Pre-transpose once (lane-dense (in, out) layout; no per-call transpose op).
        params["hidden"].append({"wt": jnp.transpose(w), "b": b.reshape(1, fan_out)})
    key, kw, kb = jax.random.split(key, 3)
    fan_in, fan_out = config.DNN_HIDDEN[-1], config.NUM_CLASS
    bound = 1.0 / jnp.sqrt(fan_in)
    w = jax.random.uniform(kw, (fan_out, fan_in), jnp.float32, -bound, bound)
    b = jax.random.uniform(kb, (fan_out,), jnp.float32, -bound, bound)
    params["out_wt"] = jnp.transpose(w)
    params["out_b"] = b.reshape(1, fan_out)
    return params


def make_dropout_masks(config, batch, key, training=True, p=0.5):
    """Inverted-dropout keep masks with the 1/(1-p) scale folded in."""
    masks = []
    for i in range(config.DNN_NUM_HIDDENS):
        key, k = jax.random.split(key)
        shape = (batch, config.DNN_HIDDEN[i])
        if training:
            keep = jax.random.bernoulli(k, 1.0 - p, shape).astype(jnp.float32)
            masks.append(keep / (1.0 - p))
        else:
            masks.append(jnp.ones(shape, jnp.float32))
    return masks


def reference_forward(x, params, masks):
    h = x
    for layer, m in zip(params["hidden"], masks):
        h = jnp.maximum(h @ layer["wt"] + layer["b"], 0.0) * m
    return h @ params["out_wt"] + params["out_b"]


# ----------------------------------------------------------------------------
if __name__ == "__main__":
    cfg = Config()
    BATCH = 4

    key = jax.random.PRNGKey(0)
    key, kx, kp, km = jax.random.split(key, 4)
    x = jax.random.normal(kx, (BATCH, cfg.DNN_IN[0]), jnp.float32)
    params = init_params(cfg, kp)

    # Training-mode dropout (nn.Dropout default); same masks feed kernel and reference.
    masks = make_dropout_masks(cfg, BATCH, km, training=True)

    out = jax.block_until_ready(dnn_classifier_forward(x, params, masks))
    out_ref = jax.block_until_ready(reference_forward(x, params, masks))

    assert out.shape == (BATCH, cfg.NUM_CLASS)
    assert bool(jnp.all(jnp.isfinite(out)))
    assert jnp.allclose(out, out_ref, rtol=1e-4, atol=1e-4)

    # Also exercise the eval (no-dropout) path once.
    eval_masks = make_dropout_masks(cfg, BATCH, km, training=False)
    out_eval = jax.block_until_ready(dnn_classifier_forward(x, params, eval_masks))
    assert jnp.allclose(out_eval, reference_forward(x, params, eval_masks),
                        rtol=1e-4, atol=1e-4)

    print("KERNEL_OK")
</pallas_src>

<mosaic_0001>
module attributes {stable_mosaic.version = 11 : i64} {
  func.func @_mlp_kernel(%arg0: i32, %arg1: memref<4x16xf32, #tpu.memory_space<vmem>>, %arg2: memref<16x64xf32, #tpu.memory_space<vmem>>, %arg3: memref<1x64xf32, #tpu.memory_space<vmem>>, %arg4: memref<4x64xf32, #tpu.memory_space<vmem>>, %arg5: memref<64x32xf32, #tpu.memory_space<vmem>>, %arg6: memref<1x32xf32, #tpu.memory_space<vmem>>, %arg7: memref<4x32xf32, #tpu.memory_space<vmem>>, %arg8: memref<32x8xf32, #tpu.memory_space<vmem>>, %arg9: memref<1x8xf32, #tpu.memory_space<vmem>>, %arg10: memref<4x8xf32, #tpu.memory_space<vmem>>) attributes {dimension_semantics = [#tpu.dimension_semantics<parallel>], iteration_bounds = array<i64: 1>, scalar_prefetch = 0 : i64, scratch_operands = 0 : i64, tpu.core_type = #tpu.core_type<tc>, window_params = [{transform_indices = @transform_0, window_bounds = array<i64: 4, 16>}, {pipeline_mode = #tpu.pipeline_mode<synchronous>, transform_indices = @transform_1, window_bounds = array<i64: 16, 64>}, {pipeline_mode = #tpu.pipeline_mode<synchronous>, transform_indices = @transform_2, window_bounds = array<i64: 1, 64>}, {transform_indices = @transform_3, window_bounds = array<i64: 4, 64>}, {pipeline_mode = #tpu.pipeline_mode<synchronous>, transform_indices = @transform_4, window_bounds = array<i64: 64, 32>}, {pipeline_mode = #tpu.pipeline_mode<synchronous>, transform_indices = @transform_5, window_bounds = array<i64: 1, 32>}, {transform_indices = @transform_6, window_bounds = array<i64: 4, 32>}, {pipeline_mode = #tpu.pipeline_mode<synchronous>, transform_indices = @transform_7, window_bounds = array<i64: 32, 8>}, {pipeline_mode = #tpu.pipeline_mode<synchronous>, transform_indices = @transform_8, window_bounds = array<i64: 1, 8>}, {transform_indices = @transform_9, window_bounds = array<i64: 4, 8>}]} {
    %c0 = arith.constant 0 : index
    %c0_0 = arith.constant 0 : index
    %0 = vector.load %arg1[%c0, %c0_0] : memref<4x16xf32, #tpu.memory_space<vmem>>, vector<4x16xf32>
    %c0_1 = arith.constant 0 : index
    %c0_2 = arith.constant 0 : index
    %1 = vector.load %arg2[%c0_1, %c0_2] : memref<16x64xf32, #tpu.memory_space<vmem>>, vector<16x64xf32>
    %cst = arith.constant dense<0.000000e+00> : vector<4x64xf32>
    %2 = tpu.matmul %0, %1, %cst {dimension_numbers = #tpu.dot_dimension_numbers<[1], [0], [0], [1], [0, 0, 1, 1], [], []>} : vector<4x16xf32>, vector<16x64xf32>, vector<4x64xf32> -> vector<4x64xf32>
    %c0_3 = arith.constant 0 : index
    %c0_4 = arith.constant 0 : index
    %3 = vector.load %arg3[%c0_3, %c0_4] : memref<1x64xf32, #tpu.memory_space<vmem>>, vector<1x64xf32>
    %4 = vector.broadcast %3 : vector<1x64xf32> to vector<4x64xf32>
    %5 = arith.addf %2, %4 : vector<4x64xf32>
    %cst_5 = arith.constant 0.000000e+00 : f32
    %6 = vector.broadcast %cst_5 : f32 to vector<4x64xf32>
    %7 = arith.maximumf %5, %6 : vector<4x64xf32>
    %c0_6 = arith.constant 0 : index
    %c0_7 = arith.constant 0 : index
    %8 = vector.load %arg4[%c0_6, %c0_7] : memref<4x64xf32, #tpu.memory_space<vmem>>, vector<4x64xf32>
    %9 = arith.mulf %7, %8 : vector<4x64xf32>
    %c0_8 = arith.constant 0 : index
    %c0_9 = arith.constant 0 : index
    %10 = vector.load %arg5[%c0_8, %c0_9] : memref<64x32xf32, #tpu.memory_space<vmem>>, vector<64x32xf32>
    %cst_10 = arith.constant dense<0.000000e+00> : vector<4x32xf32>
    %11 = tpu.matmul %9, %10, %cst_10 {dimension_numbers = #tpu.dot_dimension_numbers<[1], [0], [0], [1], [0, 0, 1, 1], [], []>} : vector<4x64xf32>, vector<64x32xf32>, vector<4x32xf32> -> vector<4x32xf32>
    %c0_11 = arith.constant 0 : index
    %c0_12 = arith.constant 0 : index
    %12 = vector.load %arg6[%c0_11, %c0_12] : memref<1x32xf32, #tpu.memory_space<vmem>>, vector<1x32xf32>
    %13 = vector.broadcast %12 : vector<1x32xf32> to vector<4x32xf32>
    %14 = arith.addf %11, %13 : vector<4x32xf32>
    %cst_13 = arith.constant 0.000000e+00 : f32
    %15 = vector.broadcast %cst_13 : f32 to vector<4x32xf32>
    %16 = arith.maximumf %14, %15 : vector<4x32xf32>
    %c0_14 = arith.constant 0 : index
    %c0_15 = arith.constant 0 : index
    %17 = vector.load %arg7[%c0_14, %c0_15] : memref<4x32xf32, #tpu.memory_space<vmem>>, vector<4x32xf32>
    %18 = arith.mulf %16, %17 : vector<4x32xf32>
    %c0_16 = arith.constant 0 : index
    %c0_17 = arith.constant 0 : index
    %19 = vector.load %arg8[%c0_16, %c0_17] : memref<32x8xf32, #tpu.memory_space<vmem>>, vector<32x8xf32>
    %cst_18 = arith.constant dense<0.000000e+00> : vector<4x8xf32>
    %20 = tpu.matmul %18, %19, %cst_18 {dimension_numbers = #tpu.dot_dimension_numbers<[1], [0], [0], [1], [0, 0, 1, 1], [], []>} : vector<4x32xf32>, vector<32x8xf32>, vector<4x8xf32> -> vector<4x8xf32>
    %c0_19 = arith.constant 0 : index
    %c0_20 = arith.constant 0 : index
    %21 = vector.load %arg9[%c0_19, %c0_20] : memref<1x8xf32, #tpu.memory_space<vmem>>, vector<1x8xf32>
    %22 = vector.broadcast %21 : vector<1x8xf32> to vector<4x8xf32>
    %23 = arith.addf %20, %22 : vector<4x8xf32>
    %c0_21 = arith.constant 0 : index
    %c0_22 = arith.constant 0 : index
    %24 = vector.load %arg10[%c0_21, %c0_22] : memref<4x8xf32, #tpu.memory_space<vmem>>, vector<4x8xf32>
    tpu.vector_store %arg10[%c0_21, %c0_22], %23 {strides = array<i32>} : memref<4x8xf32, #tpu.memory_space<vmem>>, vector<4x8xf32>,
    return
  }
  func.func @transform_0(%arg0: i32) -> (i32, i32) {
    %c0_i32 = arith.constant 0 : i32
    %c0_i32_0 = arith.constant 0 : i32
    return %arg0, %c0_i32 : i32, i32
  }
  func.func @transform_1(%arg0: i32) -> (i32, i32) {
    %c0_i32 = arith.constant 0 : i32
    %c0_i32_0 = arith.constant 0 : i32
    %c0_i32_1 = arith.constant 0 : i32
    return %c0_i32, %c0_i32_0 : i32, i32
  }
  func.func @transform_2(%arg0: i32) -> (i32, i32) {
    %c0_i32 = arith.constant 0 : i32
    %c0_i32_0 = arith.constant 0 : i32
    %c0_i32_1 = arith.constant 0 : i32
    return %c0_i32, %c0_i32_0 : i32, i32
  }
  func.func @transform_3(%arg0: i32) -> (i32, i32) {
    %c0_i32 = arith.constant 0 : i32
    %c0_i32_0 = arith.constant 0 : i32
    return %arg0, %c0_i32 : i32, i32
  }
  func.func @transform_4(%arg0: i32) -> (i32, i32) {
    %c0_i32 = arith.constant 0 : i32
    %c0_i32_0 = arith.constant 0 : i32
    %c0_i32_1 = arith.constant 0 : i32
    return %c0_i32, %c0_i32_0 : i32, i32
  }
  func.func @transform_5(%arg0: i32) -> (i32, i32) {
    %c0_i32 = arith.constant 0 : i32
    %c0_i32_0 = arith.constant 0 : i32
    %c0_i32_1 = arith.constant 0 : i32
    return %c0_i32, %c0_i32_0 : i32, i32
  }
  func.func @transform_6(%arg0: i32) -> (i32, i32) {
    %c0_i32 = arith.constant 0 : i32
    %c0_i32_0 = arith.constant 0 : i32
    return %arg0, %c0_i32 : i32, i32
  }
  func.func @transform_7(%arg0: i32) -> (i32, i32) {
    %c0_i32 = arith.constant 0 : i32
    %c0_i32_0 = arith.constant 0 : i32
    %c0_i32_1 = arith.constant 0 : i32
    return %c0_i32, %c0_i32_0 : i32, i32
  }
  func.func @transform_8(%arg0: i32) -> (i32, i32) {
    %c0_i32 = arith.constant 0 : i32
    %c0_i32_0 = arith.constant 0 : i32
    %c0_i32_1 = arith.constant 0 : i32
    return %c0_i32, %c0_i32_0 : i32, i32
  }
  func.func @transform_9(%arg0: i32) -> (i32, i32) {
    %c0_i32 = arith.constant 0 : i32
    %c0_i32_0 = arith.constant 0 : i32
    return %arg0, %c0_i32 : i32, i32
  }
}

</mosaic_0001>

<llo_original>
// kernel: tpu_custom_call.1
$region0: #{tpu_custom_call.1}
  #allocation0 [shape = 'u32[]', space=smem, size = 0x4, offset = 0x4, fixed_abs, tag = 'smem constant byte address 0x4 - core index']
  #allocation1 [shape = 'u32[144,128]{1,0:T(1,128)}', space=vmem, size = 0x12000, scoped, tag = 'internal scratch']
  %s0 = inlined_call_operand.vmem [shape: f32[4,16], index: 0, kind: input, shape index: {}]
  %s1 = inlined_call_operand.vmem [shape: f32[16,64], index: 1, kind: input, shape index: {}]
  %s2 = inlined_call_operand.vmem [shape: f32[1,64], index: 2, kind: input, shape index: {}]
  %s3 = inlined_call_operand.vmem [shape: f32[4,64], index: 3, kind: input, shape index: {}]
  %s4 = inlined_call_operand.vmem [shape: f32[64,32], index: 4, kind: input, shape index: {}]
  %s5 = inlined_call_operand.vmem [shape: f32[1,32], index: 5, kind: input, shape index: {}]
  %s6 = inlined_call_operand.vmem [shape: f32[4,32], index: 6, kind: input, shape index: {}]
  %s7 = inlined_call_operand.vmem [shape: f32[32,8], index: 7, kind: input, shape index: {}]
  %s8 = inlined_call_operand.vmem [shape: f32[1,8], index: 8, kind: input, shape index: {}]
  %s9 = inlined_call_operand.hbm [shape: f32[4,8], index: 9, kind: output, shape index: {}]
  %s10 = sld [smem:[#allocation0]]
  $region46: #{tpu_custom_call.1} parent=0
    _
  %s12 = ssub.s32 1, %s10
  %s13 = scalar_select 0, %s12, %s10
  $region1: #{tpu_custom_call.1} parent=0
    #allocation2 [shape = 'u8[2048]{0}', space=vmem, size = 0x800, scoped, tag = 'output window, operand 0, single buffered']
    #allocation3 [shape = 's32[1]{0}', space=sflag, size = 0x4, scoped, tag = 'scoped memory for tpu_custom_call.1']
    %14 = vsyncpa [#allocation3], 0
    // Predicated region
    $region2: #{tpu_custom_call.1} parent=1 // pred_check
      _
    $region3: #{tpu_custom_call.1} parent=1 // pred_check_branch
      %16 = sbr.rel (0) target = $region5
    $region4: #{tpu_custom_call.1} parent=1 // pred_region
      _
    $region5: #{tpu_custom_call.1} parent=1 // pred_fallthru
      _
    // Predicated region
    $region6: #{tpu_custom_call.1} parent=1 // pred_check
      _
    $region7: #{tpu_custom_call.1} parent=1 // pred_check_branch
      %18 = sbr.rel (0) target = $region9
    $region8: #{tpu_custom_call.1} parent=1 // pred_region
      _
    $region9: #{tpu_custom_call.1} parent=1 // pred_fallthru
      _
    // Predicated region
    $region10: #{tpu_custom_call.1} parent=1 // pred_check
      _
    $region11: #{tpu_custom_call.1} parent=1 // pred_check_branch
      %20 = sbr.rel (0) target = $region13
    $region12: #{tpu_custom_call.1} parent=1 // pred_region
      _
    $region13: #{tpu_custom_call.1} parent=1 // pred_fallthru
      _
    // Predicated region
    $region14: #{tpu_custom_call.1} parent=1 // pred_check
      _
    $region15: #{tpu_custom_call.1} parent=1 // pred_check_branch
      %22 = sbr.rel (0) target = $region17
    $region16: #{tpu_custom_call.1} parent=1 // pred_region
      _
    $region17: #{tpu_custom_call.1} parent=1 // pred_fallthru
      _
    // Predicated region
    $region18: #{tpu_custom_call.1} parent=1 // pred_check
      _
    $region19: #{tpu_custom_call.1} parent=1 // pred_check_branch
      %24 = sbr.rel (0) target = $region21
    $region20: #{tpu_custom_call.1} parent=1 // pred_region
      _
    $region21: #{tpu_custom_call.1} parent=1 // pred_fallthru
      _
    // Predicated region
    $region22: #{tpu_custom_call.1} parent=1 // pred_check
      _
    $region23: #{tpu_custom_call.1} parent=1 // pred_check_branch
      %26 = sbr.rel (0) target = $region25
    $region24: #{tpu_custom_call.1} parent=1 // pred_region
      _
    $region25: #{tpu_custom_call.1} parent=1 // pred_fallthru
      _
    // Predicated region
    $region26: #{tpu_custom_call.1} parent=1 // pred_check
      _
    $region27: #{tpu_custom_call.1} parent=1 // pred_check_branch
      %28 = sbr.rel (0) target = $region29
    $region28: #{tpu_custom_call.1} parent=1 // pred_region
      _
    $region29: #{tpu_custom_call.1} parent=1 // pred_fallthru
      _
    // Predicated region
    $region30: #{tpu_custom_call.1} parent=1 // pred_check
      _
    $region31: #{tpu_custom_call.1} parent=1 // pred_check_branch
      %30 = sbr.rel (0) target = $region33
    $region32: #{tpu_custom_call.1} parent=1 // pred_region
      _
    $region33: #{tpu_custom_call.1} parent=1 // pred_fallthru
      _
    // Predicated region
    $region34: #{tpu_custom_call.1} parent=1 // pred_check
      _
    $region35: #{tpu_custom_call.1} parent=1 // pred_check_branch
      %32 = sbr.rel (0) target = $region37
    $region36: #{tpu_custom_call.1} parent=1 // pred_region
      _
    $region37: #{tpu_custom_call.1} parent=1 // pred_fallthru
      _
    %v33 = vld [vmem:[%s0] sm:$0xf]
    %v34 = vld [vmem:[%s1] sm:$0xff]
    %v35 = vld [vmem:[%s1 + $0x8] sm:$0xff]
    %v36 = vld [vmem:[%s2] sm:$0x1]
    %v38 = vlaneseq
    %v39 = vshrl.u32 %v38, 7
    %v40 = vsub.s32 0, %v39
    %v41 = vrot.slane %v36, %v40
    %vm43 = vcmask 130048
    %v45 = vsel %vm43, %v33, 0
    %47 = vmatprep.subr.mxu0 0.0
    %48 = vmatpush1.msra.mxu0 0.0
    %49 = vmatprep.subr.mxu0 0.0
    %50 = vmatpush1.msra.mxu0 0.0
    %51 = vmatprep.subr.mxu0 0.0
    %52 = vmatpush1.msra.mxu0 0.0
    %53 = vmatprep.subr.mxu0 0.0
    %54 = vmatpush1.msra.mxu0 0.0
    %55 = vmatprep.subr.mxu0 0.0
    %56 = vmatpush1.msra.mxu0 0.0
    %57 = vmatprep.subr.mxu0 0.0
    %58 = vmatpush1.msra.mxu0 0.0
    %59 = vmatprep.subr.mxu0 0.0
    %60 = vmatpush1.msra.mxu0 0.0
    %61 = vmatprep.subr.mxu0 0.0
    %62 = vmatpush1.msra.mxu0 0.0
    %63 = vmatprep.subr.mxu0 0.0
    %64 = vmatpush1.msra.mxu0 0.0
    %65 = vmatprep.subr.mxu0 0.0
    %66 = vmatpush1.msra.mxu0 0.0
    %67 = vmatprep.subr.mxu0 0.0
    %68 = vmatpush1.msra.mxu0 0.0
    %69 = vmatprep.subr.mxu0 0.0
    %70 = vmatpush1.msra.mxu0 0.0
    %71 = vmatprep.subr.mxu0 0.0
    %72 = vmatpush1.msra.mxu0 0.0
    %73 = vmatprep.subr.mxu0 0.0
    %74 = vmatpush1.msra.mxu0 0.0
    %75 = vmatprep.subr.mxu0 0.0
    %76 = vmatpush1.msra.mxu0 %v35
    %77 = vmatprep.subr.mxu0 0.0
    %78 = vmatpush1.msra.mxu0 %v34
    %79 = vmatprep.subr.mxu0 0.0
    %80 = vmatpush2.msra.mxu0 0.0
    %81 = vmatprep.subr.mxu0 0.0
    %82 = vmatpush2.msra.mxu0 0.0
    %83 = vmatprep.subr.mxu0 0.0
    %84 = vmatpush2.msra.mxu0 0.0
    %85 = vmatprep.subr.mxu0 0.0
    %86 = vmatpush2.msra.mxu0 0.0
    %87 = vmatprep.subr.mxu0 0.0
    %88 = vmatpush2.msra.mxu0 0.0
    %89 = vmatprep.subr.mxu0 0.0
    %90 = vmatpush2.msra.mxu0 0.0
    %91 = vmatprep.subr.mxu0 0.0
    %92 = vmatpush2.msra.mxu0 0.0
    %93 = vmatprep.subr.mxu0 0.0
    %94 = vmatpush2.msra.mxu0 0.0
    %95 = vmatprep.subr.mxu0 0.0
    %96 = vmatpush2.msra.mxu0 0.0
    %97 = vmatprep.subr.mxu0 0.0
    %98 = vmatpush2.msra.mxu0 0.0
    %99 = vmatprep.subr.mxu0 0.0
    %100 = vmatpush2.msra.mxu0 0.0
    %101 = vmatprep.subr.mxu0 0.0
    %102 = vmatpush2.msra.mxu0 0.0
    %103 = vmatprep.subr.mxu0 0.0
    %104 = vmatpush2.msra.mxu0 0.0
    %105 = vmatprep.subr.mxu0 0.0
    %106 = vmatpush2.msra.mxu0 0.0
    %107 = vmatprep.subr.mxu0 0.0
    %108 = vmatpush2.msra.mxu0 0.0
    %109 = vmatprep.subr.mxu0 0.0
    %110 = vmatpush2.msra.mxu0 0.0
    %111 = vmatprep.mubr.f32.mxu0 0.0
    %112 = vmatmul.mubr.f32.gmra.mxu0 %v45
    %v113 = vpop.f32.mrf.mxu0
    %v114 = vadd.f32 %v41, %v113
    %v115 = vpop.f32.mrf.mxu0
    %116 = vdwg.mxu0
    %v117 = vmax.f32 %v114, 0.0
    %v118 = vld [vmem:[%s3] sm:$0xf]
    %v119 = vmul.f32 %v117, %v118
    %v120 = vld [vmem:[%s4] sm:$0xff]
    %v121 = vld [vmem:[%s4 + $0x8] sm:$0xff]
    %v122 = vld [vmem:[%s4 + $0x10] sm:$0xff]
    %v123 = vld [vmem:[%s4 + $0x18] sm:$0xff]
    %v124 = vld [vmem:[%s4 + $0x20] sm:$0xff]
    %v125 = vld [vmem:[%s4 + $0x28] sm:$0xff]
    %v126 = vld [vmem:[%s4 + $0x30] sm:$0xff]
    %v127 = vld [vmem:[%s4 + $0x38] sm:$0xff]
    %v128 = vld [vmem:[%s5] sm:$0x1]
    %v130 = vlaneseq
    %v131 = vshrl.u32 %v130, 7
    %v132 = vsub.s32 0, %v131
    %v133 = vrot.slane %v128, %v132
    %vm135 = vcmask 523264
    %v137 = vsel %vm135, %v119, 0
    %139 = vmatprep.subr.mxu0 0.0
    %140 = vmatpush1.msra.mxu0 0.0
    %141 = vmatprep.subr.mxu0 0.0
    %142 = vmatpush1.msra.mxu0 0.0
    %143 = vmatprep.subr.mxu0 0.0
    %144 = vmatpush1.msra.mxu0 0.0
    %145 = vmatprep.subr.mxu0 0.0
    %146 = vmatpush1.msra.mxu0 0.0
    %147 = vmatprep.subr.mxu0 0.0
    %148 = vmatpush1.msra.mxu0 0.0
    %149 = vmatprep.subr.mxu0 0.0
    %150 = vmatpush1.msra.mxu0 0.0
    %151 = vmatprep.subr.mxu0 0.0
    %152 = vmatpush1.msra.mxu0 0.0
    %153 = vmatprep.subr.mxu0 0.0
    %154 = vmatpush1.msra.mxu0 0.0
    %155 = vmatprep.subr.mxu0 0.0
    %156 = vmatpush1.msra.mxu0 %v127
    %157 = vmatprep.subr.mxu0 0.0
    %158 = vmatpush1.msra.mxu0 %v126
    %159 = vmatprep.subr.mxu0 0.0
    %160 = vmatpush1.msra.mxu0 %v125
    %161 = vmatprep.subr.mxu0 0.0
    %162 = vmatpush1.msra.mxu0 %v124
    %163 = vmatprep.subr.mxu0 0.0
    %164 = vmatpush1.msra.mxu0 %v123
    %165 = vmatprep.subr.mxu0 0.0
    %166 = vmatpush1.msra.mxu0 %v122
    %167 = vmatprep.subr.mxu0 0.0
    %168 = vmatpush1.msra.mxu0 %v121
    %169 = vmatprep.subr.mxu0 0.0
    %170 = vmatpush1.msra.mxu0 %v120
    %171 = vmatprep.subr.mxu0 0.0
    %172 = vmatpush2.msra.mxu0 0.0
    %173 = vmatprep.subr.mxu0 0.0
    %174 = vmatpush2.msra.mxu0 0.0
    %175 = vmatprep.subr.mxu0 0.0
    %176 = vmatpush2.msra.mxu0 0.0
    %177 = vmatprep.subr.mxu0 0.0
    %178 = vmatpush2.msra.mxu0 0.0
    %179 = vmatprep.subr.mxu0 0.0
    %180 = vmatpush2.msra.mxu0 0.0
    %181 = vmatprep.subr.mxu0 0.0
    %182 = vmatpush2.msra.mxu0 0.0
    %183 = vmatprep.subr.mxu0 0.0
    %184 = vmatpush2.msra.mxu0 0.0
    %185 = vmatprep.subr.mxu0 0.0
    %186 = vmatpush2.msra.mxu0 0.0
    %187 = vmatprep.subr.mxu0 0.0
    %188 = vmatpush2.msra.mxu0 0.0
    %189 = vmatprep.subr.mxu0 0.0
    %190 = vmatpush2.msra.mxu0 0.0
    %191 = vmatprep.subr.mxu0 0.0
    %192 = vmatpush2.msra.mxu0 0.0
    %193 = vmatprep.subr.mxu0 0.0
    %194 = vmatpush2.msra.mxu0 0.0
    %195 = vmatprep.subr.mxu0 0.0
    %196 = vmatpush2.msra.mxu0 0.0
    %197 = vmatprep.subr.mxu0 0.0
    %198 = vmatpush2.msra.mxu0 0.0
    %199 = vmatprep.subr.mxu0 0.0
    %200 = vmatpush2.msra.mxu0 0.0
    %201 = vmatprep.subr.mxu0 0.0
    %202 = vmatpush2.msra.mxu0 0.0
    %203 = vmatprep.mubr.f32.mxu0 0.0
    %204 = vmatmul.mubr.f32.gmra.mxu0 %v137
    %v205 = vpop.f32.mrf.mxu0
    %v206 = vadd.f32 %v133, %v205
    %v207 = vpop.f32.mrf.mxu0
    %208 = vdwg.mxu0
    %v209 = vmax.f32 %v206, 0.0
    %v210 = vld [vmem:[%s6] sm:$0xf]
    %v211 = vmul.f32 %v209, %v210
    %v212 = vld [vmem:[%s7] sm:$0xff]
    %v213 = vld [vmem:[%s7 + $0x8] sm:$0xff]
    %v214 = vld [vmem:[%s7 + $0x10] sm:$0xff]
    %v215 = vld [vmem:[%s7 + $0x18] sm:$0xff]
    %v216 = vld [vmem:[%s8] sm:$0x1]
    %v218 = vlaneseq
    %v219 = vshrl.u32 %v218, 7
    %v220 = vsub.s32 0, %v219
    %v221 = vrot.slane %v216, %v220
    %vm223 = vcmask 261120
    %v225 = vsel %vm223, %v211, 0
    %227 = vmatprep.subr.mxu0 0.0
    %228 = vmatpush1.msra.mxu0 0.0
    %229 = vmatprep.subr.mxu0 0.0
    %230 = vmatpush1.msra.mxu0 0.0
    %231 = vmatprep.subr.mxu0 0.0
    %232 = vmatpush1.msra.mxu0 0.0
    %233 = vmatprep.subr.mxu0 0.0
    %234 = vmatpush1.msra.mxu0 0.0
    %235 = vmatprep.subr.mxu0 0.0
    %236 = vmatpush1.msra.mxu0 0.0
    %237 = vmatprep.subr.mxu0 0.0
    %238 = vmatpush1.msra.mxu0 0.0
    %239 = vmatprep.subr.mxu0 0.0
    %240 = vmatpush1.msra.mxu0 0.0
    %241 = vmatprep.subr.mxu0 0.0
    %242 = vmatpush1.msra.mxu0 0.0
    %243 = vmatprep.subr.mxu0 0.0
    %244 = vmatpush1.msra.mxu0 0.0
    %245 = vmatprep.subr.mxu0 0.0
    %246 = vmatpush1.msra.mxu0 0.0
    %247 = vmatprep.subr.mxu0 0.0
    %248 = vmatpush1.msra.mxu0 0.0
    %249 = vmatprep.subr.mxu0 0.0
    %250 = vmatpush1.msra.mxu0 0.0
    %251 = vmatprep.subr.mxu0 0.0
    %252 = vmatpush1.msra.mxu0 %v215
    %253 = vmatprep.subr.mxu0 0.0
    %254 = vmatpush1.msra.mxu0 %v214
    %255 = vmatprep.subr.mxu0 0.0
    %256 = vmatpush1.msra.mxu0 %v213
    %257 = vmatprep.subr.mxu0 0.0
    %258 = vmatpush1.msra.mxu0 %v212
    %259 = vmatprep.subr.mxu0 0.0
    %260 = vmatpush2.msra.mxu0 0.0
    %261 = vmatprep.subr.mxu0 0.0
    %262 = vmatpush2.msra.mxu0 0.0
    %263 = vmatprep.subr.mxu0 0.0
    %264 = vmatpush2.msra.mxu0 0.0
    %265 = vmatprep.subr.mxu0 0.0
    %266 = vmatpush2.msra.mxu0 0.0
    %267 = vmatprep.subr.mxu0 0.0
    %268 = vmatpush2.msra.mxu0 0.0
    %269 = vmatprep.subr.mxu0 0.0
    %270 = vmatpush2.msra.mxu0 0.0
    %271 = vmatprep.subr.mxu0 0.0
    %272 = vmatpush2.msra.mxu0 0.0
    %273 = vmatprep.subr.mxu0 0.0
    %274 = vmatpush2.msra.mxu0 0.0
    %275 = vmatprep.subr.mxu0 0.0
    %276 = vmatpush2.msra.mxu0 0.0
    %277 = vmatprep.subr.mxu0 0.0
    %278 = vmatpush2.msra.mxu0 0.0
    %279 = vmatprep.subr.mxu0 0.0
    %280 = vmatpush2.msra.mxu0 0.0
    %281 = vmatprep.subr.mxu0 0.0
    %282 = vmatpush2.msra.mxu0 0.0
    %283 = vmatprep.subr.mxu0 0.0
    %284 = vmatpush2.msra.mxu0 0.0
    %285 = vmatprep.subr.mxu0 0.0
    %286 = vmatpush2.msra.mxu0 0.0
    %287 = vmatprep.subr.mxu0 0.0
    %288 = vmatpush2.msra.mxu0 0.0
    %289 = vmatprep.subr.mxu0 0.0
    %290 = vmatpush2.msra.mxu0 0.0
    %291 = vmatprep.mubr.f32.mxu0 0.0
    %292 = vmatmul.mubr.f32.gmra.mxu0 %v225
    %v293 = vpop.f32.mrf.mxu0
    %v294 = vadd.f32 %v221, %v293
    %v295 = vpop.f32.mrf.mxu0
    %296 = vdwg.mxu0
    %vm297 = vcmask 60416
    %298 = vst.msk [vmem:[#allocation2] sm:$0xf] %vm297, %v294
    // Predicated region
    $region38: #{tpu_custom_call.1} parent=1 // pred_check
      _
    $region39: #{tpu_custom_call.1} parent=1 // pred_check_branch
      %300 = sbr.rel (0) target = $region41
    $region40: #{tpu_custom_call.1} parent=1 // pred_region
      %s302 = ssub.s32 64, 64
      %303 = vsyncadd [#allocation3], %s302
      %s305 = sshll.u32 [#allocation2], 4
      %s306 = int_to_ptr.vmem [resolvable:$true] %s305
      %308 = dma.vmem_to_hbm [thread:$0]  %s306, 64, %s9, [#allocation3]
    $region41: #{tpu_custom_call.1} parent=1 // pred_fallthru
      _
    // Predicated region
    $region42: #{tpu_custom_call.1} parent=1 // pred_check
      _
    $region43: #{tpu_custom_call.1} parent=1 // pred_check_branch
      %310 = sbr.rel (0) target = $region45
    $region44: #{tpu_custom_call.1} parent=1 // pred_region
      %311 = dma.done [#allocation3], 64
    $region45: #{tpu_custom_call.1} parent=1 // pred_fallthru
      _
    %312 = vsyncpa [#allocation3], 1

</llo_original>
